<compile_context>
chip_gen: v6e
topology: v6e:2x2x1
jax: 0.10.0
libtpu: 0.0.40
codegen_flags: <defaults>
</compile_context>

<pallas_src>
import math
import functools

import jax
import jax.numpy as jnp
from jax.experimental import pallas as pl
from jax.experimental.pallas import tpu as pltpu


def self_attention_kernel(x_ref, wq_ref, bq_ref, wk_ref, bk_ref, wv_ref, bv_ref,
                          o_ref, *, seq, d):
    # x_ref:  (TB*S, D)  flattened batch block (lane-dense, (8,128)-friendly slab)
    # w*_ref: (D, D)     projection weights, stored (in, out); Wq/bq pre-scaled by 1/sqrt(D)
    # b*_ref: (1, D)
    # o_ref:  (TB, D)
    x2 = x_ref[...]                                       # (TB*S, D)
    tb = x2.shape[0] // seq

    # ---- three separate projections (D < 128: avoids lane-misaligned fused slices) --
    q2 = jnp.dot(x2, wq_ref[...], preferred_element_type=jnp.float32) + bq_ref[...]
    k2 = jnp.dot(x2, wk_ref[...], preferred_element_type=jnp.float32) + bk_ref[...]
    v2 = jnp.dot(x2, wv_ref[...], preferred_element_type=jnp.float32) + bv_ref[...]

    # Split the leading (sublane) dim only -- relayout-free when S is a multiple of 8.
    q = q2.reshape(tb, seq, d)
    k = k2.reshape(tb, seq, d)
    v = v2.reshape(tb, seq, d)

    # ---- scores = (Q/sqrt(D)) @ K^T; scale already folded into Wq/bq at prep time ---
    scores = jnp.einsum("bqd,bkd->bqk", q, k,
                        preferred_element_type=jnp.float32)        # (TB, S, S)

    # ---- numerically stable softmax; reciprocal-multiply normalization --------------
    # TODO(synk): for large S, tile over K/V with online softmax (flash pattern) so the
    # (TB,S,S) buffers never materialize; the mean-over-q folding composes with it.
    m = jnp.max(scores, axis=-1, keepdims=True)
    e = jnp.exp(scores - m)
    inv = pl.reciprocal(jnp.sum(e, axis=-1, keepdims=True), approx=False)
    att = e * inv                                                  # (TB, S, S)

    # ---- mean over sequence folded into the value matmul:
    #      mean_q(att @ V) == (mean_q att) @ V  ->  (TB,1,S) @ (TB,S,D)
    att_mean = jnp.mean(att, axis=1, keepdims=True)                # (TB, 1, S)
    out = jnp.einsum("bqk,bkd->bqd", att_mean, v,
                     preferred_element_type=jnp.float32)           # (TB, 1, D)
    o_ref[...] = out[:, 0, :]                                      # (TB, D)


def prepare_self_attention_params(wq, bq, wk, bk, wv, bv, d):
    """One-time weight prep (call ONCE, outside the per-step path).

    Folds the attention scale 1/sqrt(D) into the query projection so the kernel
    never touches the (TB,S,S) scores tensor with a VPU scaling pass.
    """
    norm_fact = jnp.float32(1.0 / math.sqrt(d))
    return (wq * norm_fact, bq * norm_fact, wk, bk, wv, bv)


def self_attention(x, params, *, batch_block=None):
    """x: (B, S, D); params from prepare_self_attention_params.

    batch_block: batch elements per grid step.  Default = B (single grid step; the
    right choice on single-TC v5e/v6e, and on v7x whenever B is small).  On v7x with
    large B pass batch_block = B//2 to shard the 'parallel' axis across both
    TensorCores -- it must then be a multiple of 8 so output blocks stay unmasked,
    and should be re-derived against v7x's 64 MiB VMEM (the S^2 score buffers are
    the first thing to overflow there).
    """
    B, S, D = x.shape
    wq, bq, wk, bk, wv, bv = params

    if batch_block is None:
        batch_block = B
    assert B % batch_block == 0, (B, batch_block)
    # Output block's second-to-last dim must be a multiple of 8 or equal the full B.
    assert batch_block == B or batch_block % 8 == 0, (B, batch_block)
    grid = (B // batch_block,)

    # Flatten in the wrapper (free reshape of a contiguous array) so the kernel's x
    # block is a clean 2-D (batch_block*S, D) slab.
    x2 = x.reshape(B * S, D)

    kernel = functools.partial(self_attention_kernel, seq=S, d=D)
    full2d = lambda i: (0, 0)

    return pl.pallas_call(
        kernel,
        out_shape=jax.ShapeDtypeStruct((B, D), jnp.float32),
        grid_spec=pltpu.PrefetchScalarGridSpec(
            num_scalar_prefetch=0,
            grid=grid,
            in_specs=[
                pl.BlockSpec((batch_block * S, D), lambda i: (i, 0)),  # x (flattened)
                pl.BlockSpec((D, D), full2d),                          # Wq (pre-scaled)
                pl.BlockSpec((1, D), full2d),                          # bq (pre-scaled)
                pl.BlockSpec((D, D), full2d),                          # Wk
                pl.BlockSpec((1, D), full2d),                          # bk
                pl.BlockSpec((D, D), full2d),                          # Wv
                pl.BlockSpec((1, D), full2d),                          # bv
            ],
            out_specs=pl.BlockSpec((batch_block, D), lambda i: (i, 0)),
        ),
        compiler_params=pltpu.CompilerParams(
            dimension_semantics=("parallel",)),
    )(x2, wq, bq, wk, bk, wv, bv)


def reference(x, wk, bk, wq, bq, wv, bv):
    D = x.shape[-1]
    K = x @ wk + bk
    Q = x @ wq + bq
    V = x @ wv + bv
    scores = jnp.einsum("bsd,btd->bst", Q, K) / math.sqrt(D)
    att = jax.nn.softmax(scores, axis=-1)
    out = jnp.einsum("bst,btd->bsd", att, V)
    return jnp.mean(out, axis=1)


if __name__ == "__main__":
    B, S, D = 2, 8, 32   # attention_size = 32

    key = jax.random.PRNGKey(0)
    kx, k1, k2, k3, k4, k5, k6 = jax.random.split(key, 7)

    x = jax.random.normal(kx, (B, S, D), dtype=jnp.float32)

    # Deterministic "Linear" params (PyTorch: y = x @ W^T + b, W is (out, in)).
    # Build W as (out, in) then transpose to (in, out) for the kernel.
    bound = 1.0 / math.sqrt(D)
    wk_t = jax.random.uniform(k1, (D, D), minval=-bound, maxval=bound, dtype=jnp.float32).T
    bk = jax.random.uniform(k2, (1, D), minval=-bound, maxval=bound, dtype=jnp.float32)
    wq_t = jax.random.uniform(k3, (D, D), minval=-bound, maxval=bound, dtype=jnp.float32).T
    bq = jax.random.uniform(k4, (1, D), minval=-bound, maxval=bound, dtype=jnp.float32)
    wv_t = jax.random.uniform(k5, (D, D), minval=-bound, maxval=bound, dtype=jnp.float32).T
    bv = jax.random.uniform(k6, (1, D), minval=-bound, maxval=bound, dtype=jnp.float32)

    # One-time weight prep (hoisted out of the per-call path).
    params = prepare_self_attention_params(wq_t, bq, wk_t, bk, wv_t, bv, D)

    out = self_attention(x, params)
    out = jax.block_until_ready(out)

    ref = reference(x, wk_t, bk, wq_t, bq, wv_t, bv)
    assert out.shape == (B, D), out.shape
    assert jnp.allclose(out, ref, atol=1e-5, rtol=1e-5), float(jnp.max(jnp.abs(out - ref)))

    print("KERNEL_OK")
</pallas_src>

<mosaic_0001>
module attributes {stable_mosaic.version = 11 : i64} {
  func.func @self_attention_kernel(%arg0: i32, %arg1: memref<16x32xf32, #tpu.memory_space<vmem>>, %arg2: memref<32x32xf32, #tpu.memory_space<vmem>>, %arg3: memref<1x32xf32, #tpu.memory_space<vmem>>, %arg4: memref<32x32xf32, #tpu.memory_space<vmem>>, %arg5: memref<1x32xf32, #tpu.memory_space<vmem>>, %arg6: memref<32x32xf32, #tpu.memory_space<vmem>>, %arg7: memref<1x32xf32, #tpu.memory_space<vmem>>, %arg8: memref<2x32xf32, #tpu.memory_space<vmem>>) attributes {dimension_semantics = [#tpu.dimension_semantics<parallel>], iteration_bounds = array<i64: 1>, scalar_prefetch = 0 : i64, scratch_operands = 0 : i64, tpu.core_type = #tpu.core_type<tc>, window_params = [{transform_indices = @transform_0, window_bounds = array<i64: 16, 32>}, {pipeline_mode = #tpu.pipeline_mode<synchronous>, transform_indices = @transform_1, window_bounds = array<i64: 32, 32>}, {pipeline_mode = #tpu.pipeline_mode<synchronous>, transform_indices = @transform_2, window_bounds = array<i64: 1, 32>}, {pipeline_mode = #tpu.pipeline_mode<synchronous>, transform_indices = @transform_3, window_bounds = array<i64: 32, 32>}, {pipeline_mode = #tpu.pipeline_mode<synchronous>, transform_indices = @transform_4, window_bounds = array<i64: 1, 32>}, {pipeline_mode = #tpu.pipeline_mode<synchronous>, transform_indices = @transform_5, window_bounds = array<i64: 32, 32>}, {pipeline_mode = #tpu.pipeline_mode<synchronous>, transform_indices = @transform_6, window_bounds = array<i64: 1, 32>}, {transform_indices = @transform_7, window_bounds = array<i64: 2, 32>}]} {
    %c0 = arith.constant 0 : index
    %c0_0 = arith.constant 0 : index
    %0 = vector.load %arg1[%c0, %c0_0] : memref<16x32xf32, #tpu.memory_space<vmem>>, vector<16x32xf32>
    %c0_1 = arith.constant 0 : index
    %c0_2 = arith.constant 0 : index
    %1 = vector.load %arg2[%c0_1, %c0_2] : memref<32x32xf32, #tpu.memory_space<vmem>>, vector<32x32xf32>
    %cst = arith.constant dense<0.000000e+00> : vector<16x32xf32>
    %2 = tpu.matmul %0, %1, %cst {dimension_numbers = #tpu.dot_dimension_numbers<[1], [0], [0], [1], [0, 0, 1, 1], [], []>} : vector<16x32xf32>, vector<32x32xf32>, vector<16x32xf32> -> vector<16x32xf32>
    %c0_3 = arith.constant 0 : index
    %c0_4 = arith.constant 0 : index
    %3 = vector.load %arg3[%c0_3, %c0_4] : memref<1x32xf32, #tpu.memory_space<vmem>>, vector<1x32xf32>
    %4 = vector.broadcast %3 : vector<1x32xf32> to vector<16x32xf32>
    %5 = arith.addf %2, %4 : vector<16x32xf32>
    %c0_5 = arith.constant 0 : index
    %c0_6 = arith.constant 0 : index
    %6 = vector.load %arg4[%c0_5, %c0_6] : memref<32x32xf32, #tpu.memory_space<vmem>>, vector<32x32xf32>
    %cst_7 = arith.constant dense<0.000000e+00> : vector<16x32xf32>
    %7 = tpu.matmul %0, %6, %cst_7 {dimension_numbers = #tpu.dot_dimension_numbers<[1], [0], [0], [1], [0, 0, 1, 1], [], []>} : vector<16x32xf32>, vector<32x32xf32>, vector<16x32xf32> -> vector<16x32xf32>
    %c0_8 = arith.constant 0 : index
    %c0_9 = arith.constant 0 : index
    %8 = vector.load %arg5[%c0_8, %c0_9] : memref<1x32xf32, #tpu.memory_space<vmem>>, vector<1x32xf32>
    %9 = vector.broadcast %8 : vector<1x32xf32> to vector<16x32xf32>
    %10 = arith.addf %7, %9 : vector<16x32xf32>
    %c0_10 = arith.constant 0 : index
    %c0_11 = arith.constant 0 : index
    %11 = vector.load %arg6[%c0_10, %c0_11] : memref<32x32xf32, #tpu.memory_space<vmem>>, vector<32x32xf32>
    %cst_12 = arith.constant dense<0.000000e+00> : vector<16x32xf32>
    %12 = tpu.matmul %0, %11, %cst_12 {dimension_numbers = #tpu.dot_dimension_numbers<[1], [0], [0], [1], [0, 0, 1, 1], [], []>} : vector<16x32xf32>, vector<32x32xf32>, vector<16x32xf32> -> vector<16x32xf32>
    %c0_13 = arith.constant 0 : index
    %c0_14 = arith.constant 0 : index
    %13 = vector.load %arg7[%c0_13, %c0_14] : memref<1x32xf32, #tpu.memory_space<vmem>>, vector<1x32xf32>
    %14 = vector.broadcast %13 : vector<1x32xf32> to vector<16x32xf32>
    %15 = arith.addf %12, %14 : vector<16x32xf32>
    %16 = vector.shape_cast %5 : vector<16x32xf32> to vector<2x8x32xf32>
    %17 = vector.shape_cast %10 : vector<16x32xf32> to vector<2x8x32xf32>
    %18 = vector.shape_cast %15 : vector<16x32xf32> to vector<2x8x32xf32>
    "tpu.trace_start"() <{level = 10 : i32, message = "bqd,bkd->bqk"}> : () -> ()
    %cst_15 = arith.constant dense<0.000000e+00> : vector<2x8x8xf32>
    %19 = tpu.matmul %16, %17, %cst_15 {dimension_numbers = #tpu.dot_dimension_numbers<[2], [2], [1], [1], [0, 0, 0, 1, 1, 1], [0], [0]>} : vector<2x8x32xf32>, vector<2x8x32xf32>, vector<2x8x8xf32> -> vector<2x8x8xf32>
    "tpu.trace_stop"() : () -> ()
    %cst_16 = arith.constant dense<0xFF800000> : vector<2x8xf32>
    %20 = vector.multi_reduction <maximumf>, %19, %cst_16 [2] : vector<2x8x8xf32> to vector<2x8xf32>
    %21 = vector.shape_cast %20 : vector<2x8xf32> to vector<2x8x1xf32>
    %22 = vector.broadcast %21 : vector<2x8x1xf32> to vector<2x8x8xf32>
    %23 = arith.subf %19, %22 : vector<2x8x8xf32>
    %24 = math.exp %23 : vector<2x8x8xf32>
    %cst_17 = arith.constant dense<0.000000e+00> : vector<2x8xf32>
    %25 = vector.multi_reduction <add>, %24, %cst_17 [2] : vector<2x8x8xf32> to vector<2x8xf32>
    %26 = vector.shape_cast %25 : vector<2x8xf32> to vector<2x8x1xf32>
    %27 = tpu.reciprocal %26 : vector<2x8x1xf32> -> vector<2x8x1xf32>
    %28 = vector.broadcast %27 : vector<2x8x1xf32> to vector<2x8x8xf32>
    %29 = arith.mulf %24, %28 : vector<2x8x8xf32>
    %cst_18 = arith.constant dense<0.000000e+00> : vector<2x8xf32>
    %30 = vector.multi_reduction <add>, %29, %cst_18 [1] : vector<2x8x8xf32> to vector<2x8xf32>
    %31 = vector.shape_cast %30 : vector<2x8xf32> to vector<2x1x8xf32>
    %cst_19 = arith.constant 8.000000e+00 : f32
    %32 = vector.broadcast %cst_19 : f32 to vector<2x1x8xf32>
    %33 = arith.divf %31, %32 : vector<2x1x8xf32>
    "tpu.trace_start"() <{level = 10 : i32, message = "bqk,bkd->bqd"}> : () -> ()
    %cst_20 = arith.constant dense<0.000000e+00> : vector<2x1x32xf32>
    %34 = tpu.matmul %33, %18, %cst_20 {dimension_numbers = #tpu.dot_dimension_numbers<[2], [1], [1], [2], [0, 0, 0, 1, 1, 2], [0], [0]>} : vector<2x1x8xf32>, vector<2x8x32xf32>, vector<2x1x32xf32> -> vector<2x1x32xf32>
    "tpu.trace_stop"() : () -> ()
    %35 = vector.shape_cast %34 : vector<2x1x32xf32> to vector<2x32xf32>
    %c0_21 = arith.constant 0 : index
    %c0_22 = arith.constant 0 : index
    %36 = vector.load %arg8[%c0_21, %c0_22] : memref<2x32xf32, #tpu.memory_space<vmem>>, vector<2x32xf32>
    tpu.vector_store %arg8[%c0_21, %c0_22], %35 {strides = array<i32>} : memref<2x32xf32, #tpu.memory_space<vmem>>, vector<2x32xf32>,
    return
  }
  func.func @transform_0(%arg0: i32) -> (i32, i32) {
    %c0_i32 = arith.constant 0 : i32
    %c0_i32_0 = arith.constant 0 : i32
    return %arg0, %c0_i32 : i32, i32
  }
  func.func @transform_1(%arg0: i32) -> (i32, i32) {
    %c0_i32 = arith.constant 0 : i32
    %c0_i32_0 = arith.constant 0 : i32
    %c0_i32_1 = arith.constant 0 : i32
    return %c0_i32, %c0_i32_0 : i32, i32
  }
  func.func @transform_2(%arg0: i32) -> (i32, i32) {
    %c0_i32 = arith.constant 0 : i32
    %c0_i32_0 = arith.constant 0 : i32
    %c0_i32_1 = arith.constant 0 : i32
    return %c0_i32, %c0_i32_0 : i32, i32
  }
  func.func @transform_3(%arg0: i32) -> (i32, i32) {
    %c0_i32 = arith.constant 0 : i32
    %c0_i32_0 = arith.constant 0 : i32
    %c0_i32_1 = arith.constant 0 : i32
    return %c0_i32, %c0_i32_0 : i32, i32
  }
  func.func @transform_4(%arg0: i32) -> (i32, i32) {
    %c0_i32 = arith.constant 0 : i32
    %c0_i32_0 = arith.constant 0 : i32
    %c0_i32_1 = arith.constant 0 : i32
    return %c0_i32, %c0_i32_0 : i32, i32
  }
  func.func @transform_5(%arg0: i32) -> (i32, i32) {
    %c0_i32 = arith.constant 0 : i32
    %c0_i32_0 = arith.constant 0 : i32
    %c0_i32_1 = arith.constant 0 : i32
    return %c0_i32, %c0_i32_0 : i32, i32
  }
  func.func @transform_6(%arg0: i32) -> (i32, i32) {
    %c0_i32 = arith.constant 0 : i32
    %c0_i32_0 = arith.constant 0 : i32
    %c0_i32_1 = arith.constant 0 : i32
    return %c0_i32, %c0_i32_0 : i32, i32
  }
  func.func @transform_7(%arg0: i32) -> (i32, i32) {
    %c0_i32 = arith.constant 0 : i32
    %c0_i32_0 = arith.constant 0 : i32
    return %arg0, %c0_i32 : i32, i32
  }
}

</mosaic_0001>

<llo_original>
// kernel: tpu_custom_call.1
$region0: #{tpu_custom_call.1}
  #allocation0 [shape = 'u32[]', space=smem, size = 0x4, offset = 0x4, fixed_abs, tag = 'smem constant byte address 0x4 - core index']
  #allocation1 [shape = 'u32[144,128]{1,0:T(1,128)}', space=vmem, size = 0x12000, scoped, tag = 'internal scratch']
  %s0 = inlined_call_operand.hbm [shape: f32[16,32], index: 0, kind: input, shape index: {}]
  %s1 = inlined_call_operand.hbm [shape: f32[32,32], index: 1, kind: input, shape index: {}]
  %s2 = inlined_call_operand.vmem [shape: f32[1,32], index: 2, kind: input, shape index: {}]
  %s3 = inlined_call_operand.hbm [shape: f32[32,32], index: 3, kind: input, shape index: {}]
  %s4 = inlined_call_operand.vmem [shape: f32[1,32], index: 4, kind: input, shape index: {}]
  %s5 = inlined_call_operand.hbm [shape: f32[32,32], index: 5, kind: input, shape index: {}]
  %s6 = inlined_call_operand.vmem [shape: f32[1,32], index: 6, kind: input, shape index: {}]
  %s7 = inlined_call_operand.hbm [shape: f32[2,32], index: 7, kind: output, shape index: {}]
  %s8 = sld [smem:[#allocation0]]
  $region54: #{tpu_custom_call.1} parent=0
    _
  %s10 = ssub.s32 1, %s8
  %s11 = scalar_select 0, %s10, %s8
  $region1: #{tpu_custom_call.1} parent=0
    #allocation2 [shape = 'u8[8192]{0}', space=vmem, size = 0x2000, scoped, tag = 'input window, operand 0, single buffered']
    #allocation3 [shape = 's32[1]{0}', space=sflag, size = 0x4, scoped, tag = 'scoped memory for tpu_custom_call.1']
    #allocation4 [shape = 's32[1]{0}', space=sflag, size = 0x4, scoped, tag = 'scoped memory for tpu_custom_call.1']
    #allocation5 [shape = 'u8[16384]{0}', space=vmem, size = 0x4000, scoped, tag = 'input window, operand 1, single buffered']
    #allocation6 [shape = 's32[1]{0}', space=sflag, size = 0x4, scoped, tag = 'scoped memory for tpu_custom_call.1']
    #allocation7 [shape = 'u8[16384]{0}', space=vmem, size = 0x4000, scoped, tag = 'input window, operand 3, single buffered']
    #allocation8 [shape = 'u8[16384]{0}', space=vmem, size = 0x4000, scoped, tag = 'input window, operand 5, single buffered']
    #allocation9 [shape = 's32[1]{0}', space=sflag, size = 0x4, scoped, tag = 'scoped memory for tpu_custom_call.1']
    #allocation10 [shape = 'u8[1024]{0}', space=vmem, size = 0x400, scoped, tag = 'output window, operand 0, single buffered']
    %12 = vsyncpa [#allocation3], 0
    %13 = vsyncpa [#allocation6], 0
    %14 = vsyncpa [#allocation9], 0
    %15 = vsyncpa [#allocation4], 0
    // Predicated region
    $region2: #{tpu_custom_call.1} parent=1 // pred_check
      _
    $region3: #{tpu_custom_call.1} parent=1 // pred_check_branch
      %17 = sbr.rel (0) target = $region5
    $region4: #{tpu_custom_call.1} parent=1 // pred_region
      %s19 = ssub.s32 256, 256
      %20 = vsyncadd [#allocation3], %s19
      %s21 = sshll.u32 [#allocation2], 4
      %s22 = int_to_ptr.vmem [resolvable:$true] %s21
      %27 = dma.hbm_to_vmem [thread:$0]  %s0, 256, %s22, [#allocation3], 128, 128, 8
    $region5: #{tpu_custom_call.1} parent=1 // pred_fallthru
      _
    // Predicated region
    $region6: #{tpu_custom_call.1} parent=1 // pred_check
      _
    $region7: #{tpu_custom_call.1} parent=1 // pred_check_branch
      %29 = sbr.rel (0) target = $region9
    $region8: #{tpu_custom_call.1} parent=1 // pred_region
      %s31 = ssub.s32 512, 512
      %32 = vsyncadd [#allocation6], %s31
      %s33 = sshll.u32 [#allocation5], 4
      %s34 = int_to_ptr.vmem [resolvable:$true] %s33
      %39 = dma.hbm_to_vmem [thread:$0]  %s1, 512, %s34, [#allocation6], 128, 128, 8
    $region9: #{tpu_custom_call.1} parent=1 // pred_fallthru
      _
    // Predicated region
    $region10: #{tpu_custom_call.1} parent=1 // pred_check
      _
    $region11: #{tpu_custom_call.1} parent=1 // pred_check_branch
      %41 = sbr.rel (0) target = $region13
    $region12: #{tpu_custom_call.1} parent=1 // pred_region
      _
    $region13: #{tpu_custom_call.1} parent=1 // pred_fallthru
      _
    // Predicated region
    $region14: #{tpu_custom_call.1} parent=1 // pred_check
      _
    $region15: #{tpu_custom_call.1} parent=1 // pred_check_branch
      %43 = sbr.rel (0) target = $region17
    $region16: #{tpu_custom_call.1} parent=1 // pred_region
      %s45 = ssub.s32 512, 512
      %46 = vsyncadd [#allocation6], %s45
      %s47 = sshll.u32 [#allocation7], 4
      %s48 = int_to_ptr.vmem [resolvable:$true] %s47
      %53 = dma.hbm_to_vmem [thread:$0]  %s3, 512, %s48, [#allocation6], 128, 128, 8
    $region17: #{tpu_custom_call.1} parent=1 // pred_fallthru
      _
    // Predicated region
    $region18: #{tpu_custom_call.1} parent=1 // pred_check
      _
    $region19: #{tpu_custom_call.1} parent=1 // pred_check_branch
      %55 = sbr.rel (0) target = $region21
    $region20: #{tpu_custom_call.1} parent=1 // pred_region
      _
    $region21: #{tpu_custom_call.1} parent=1 // pred_fallthru
      _
    // Predicated region
    $region22: #{tpu_custom_call.1} parent=1 // pred_check
      _
    $region23: #{tpu_custom_call.1} parent=1 // pred_check_branch
      %57 = sbr.rel (0) target = $region25
    $region24: #{tpu_custom_call.1} parent=1 // pred_region
      %s59 = ssub.s32 512, 512
      %60 = vsyncadd [#allocation9], %s59
      %s61 = sshll.u32 [#allocation8], 4
      %s62 = int_to_ptr.vmem [resolvable:$true] %s61
      %67 = dma.hbm_to_vmem [thread:$0]  %s5, 512, %s62, [#allocation9], 128, 128, 8
    $region25: #{tpu_custom_call.1} parent=1 // pred_fallthru
      _
    // Predicated region
    $region26: #{tpu_custom_call.1} parent=1 // pred_check
      _
    $region27: #{tpu_custom_call.1} parent=1 // pred_check_branch
      %69 = sbr.rel (0) target = $region29
    $region28: #{tpu_custom_call.1} parent=1 // pred_region
      _
    $region29: #{tpu_custom_call.1} parent=1 // pred_fallthru
      _
    // Predicated region
    $region30: #{tpu_custom_call.1} parent=1 // pred_check
      _
    $region31: #{tpu_custom_call.1} parent=1 // pred_check_branch
      %71 = sbr.rel (0) target = $region33
    $region32: #{tpu_custom_call.1} parent=1 // pred_region
      %72 = dma.done [#allocation3], 256
    $region33: #{tpu_custom_call.1} parent=1 // pred_fallthru
      _
    // Predicated region
    $region34: #{tpu_custom_call.1} parent=1 // pred_check
      _
    $region35: #{tpu_custom_call.1} parent=1 // pred_check_branch
      %74 = sbr.rel (0) target = $region37
    $region36: #{tpu_custom_call.1} parent=1 // pred_region
      %75 = dma.done [#allocation6], 512
    $region37: #{tpu_custom_call.1} parent=1 // pred_fallthru
      _
    // Predicated region
    $region38: #{tpu_custom_call.1} parent=1 // pred_check
      _
    $region39: #{tpu_custom_call.1} parent=1 // pred_check_branch
      %77 = sbr.rel (0) target = $region41
    $region40: #{tpu_custom_call.1} parent=1 // pred_region
      %78 = dma.done [#allocation6], 512
    $region41: #{tpu_custom_call.1} parent=1 // pred_fallthru
      _
    // Predicated region
    $region42: #{tpu_custom_call.1} parent=1 // pred_check
      _
    $region43: #{tpu_custom_call.1} parent=1 // pred_check_branch
      %80 = sbr.rel (0) target = $region45
    $region44: #{tpu_custom_call.1} parent=1 // pred_region
      %81 = dma.done [#allocation9], 512
    $region45: #{tpu_custom_call.1} parent=1 // pred_fallthru
      _
    %v82 = vld [vmem:[#allocation2] sm:$0xff]
    %v83 = vld [vmem:[#allocation2 + $0x8] sm:$0xff]
    %v84 = vld [vmem:[#allocation5] sm:$0xff]
    %v85 = vld [vmem:[#allocation5 + $0x8] sm:$0xff]
    %v86 = vld [vmem:[#allocation5 + $0x10] sm:$0xff]
    %v87 = vld [vmem:[#allocation5 + $0x18] sm:$0xff]
    %v88 = vld [vmem:[%s2] sm:$0x1]
    %v90 = vlaneseq
    %v91 = vshrl.u32 %v90, 7
    %v92 = vsub.s32 0, %v91
    %v93 = vrot.slane %v88, %v92
    %vm95 = vcmask 261120
    %v97 = vsel %vm95, %v82, 0
    %v100 = vsel %vm95, %v83, 0
    %102 = vmatprep.subr.mxu0 0.0
    %103 = vmatpush1.msra.mxu0 0.0
    %104 = vmatprep.subr.mxu0 0.0
    %105 = vmatpush1.msra.mxu0 0.0
    %106 = vmatprep.subr.mxu0 0.0
    %107 = vmatpush1.msra.mxu0 0.0
    %108 = vmatprep.subr.mxu0 0.0
    %109 = vmatpush1.msra.mxu0 0.0
    %110 = vmatprep.subr.mxu0 0.0
    %111 = vmatpush1.msra.mxu0 0.0
    %112 = vmatprep.subr.mxu0 0.0
    %113 = vmatpush1.msra.mxu0 0.0
    %114 = vmatprep.subr.mxu0 0.0
    %115 = vmatpush1.msra.mxu0 0.0
    %116 = vmatprep.subr.mxu0 0.0
    %117 = vmatpush1.msra.mxu0 0.0
    %118 = vmatprep.subr.mxu0 0.0
    %119 = vmatpush1.msra.mxu0 0.0
    %120 = vmatprep.subr.mxu0 0.0
    %121 = vmatpush1.msra.mxu0 0.0
    %122 = vmatprep.subr.mxu0 0.0
    %123 = vmatpush1.msra.mxu0 0.0
    %124 = vmatprep.subr.mxu0 0.0
    %125 = vmatpush1.msra.mxu0 0.0
    %126 = vmatprep.subr.mxu0 0.0
    %127 = vmatpush1.msra.mxu0 %v87
    %128 = vmatprep.subr.mxu0 0.0
    %129 = vmatpush1.msra.mxu0 %v86
    %130 = vmatprep.subr.mxu0 0.0
    %131 = vmatpush1.msra.mxu0 %v85
    %132 = vmatprep.subr.mxu0 0.0
    %133 = vmatpush1.msra.mxu0 %v84
    %134 = vmatprep.subr.mxu0 0.0
    %135 = vmatpush2.msra.mxu0 0.0
    %136 = vmatprep.subr.mxu0 0.0
    %137 = vmatpush2.msra.mxu0 0.0
    %138 = vmatprep.subr.mxu0 0.0
    %139 = vmatpush2.msra.mxu0 0.0
    %140 = vmatprep.subr.mxu0 0.0
    %141 = vmatpush2.msra.mxu0 0.0
    %142 = vmatprep.subr.mxu0 0.0
    %143 = vmatpush2.msra.mxu0 0.0
    %144 = vmatprep.subr.mxu0 0.0
    %145 = vmatpush2.msra.mxu0 0.0
    %146 = vmatprep.subr.mxu0 0.0
    %147 = vmatpush2.msra.mxu0 0.0
    %148 = vmatprep.subr.mxu0 0.0
    %149 = vmatpush2.msra.mxu0 0.0
    %150 = vmatprep.subr.mxu0 0.0
    %151 = vmatpush2.msra.mxu0 0.0
    %152 = vmatprep.subr.mxu0 0.0
    %153 = vmatpush2.msra.mxu0 0.0
    %154 = vmatprep.subr.mxu0 0.0
    %155 = vmatpush2.msra.mxu0 0.0
    %156 = vmatprep.subr.mxu0 0.0
    %157 = vmatpush2.msra.mxu0 0.0
    %158 = vmatprep.subr.mxu0 0.0
    %159 = vmatpush2.msra.mxu0 0.0
    %160 = vmatprep.subr.mxu0 0.0
    %161 = vmatpush2.msra.mxu0 0.0
    %162 = vmatprep.subr.mxu0 0.0
    %163 = vmatpush2.msra.mxu0 0.0
    %164 = vmatprep.subr.mxu0 0.0
    %165 = vmatpush2.msra.mxu0 0.0
    %166 = vmatprep.mubr.f32.mxu0 0.0
    %167 = vmatmul.mubr.f32.gmra.mxu0 %v97
    %v168 = vpop.f32.mrf.mxu0
    %v169 = vadd.f32 %v93, %v168
    %v170 = vpop.f32.mrf.mxu0
    %171 = vmatprep.mubr.f32.mxu0 0.0
    %172 = vmatmul.mubr.f32.gmra.mxu0 %v100
    %v173 = vpop.f32.mrf.mxu0
    %v174 = vadd.f32 %v93, %v173
    %v175 = vpop.f32.mrf.mxu0
    %176 = vdwg.mxu0
    %v177 = vld [vmem:[#allocation7] sm:$0xff]
    %v178 = vld [vmem:[#allocation7 + $0x8] sm:$0xff]
    %v179 = vld [vmem:[#allocation7 + $0x10] sm:$0xff]
    %v180 = vld [vmem:[#allocation7 + $0x18] sm:$0xff]
    %v181 = vld [vmem:[%s4] sm:$0x1]
    %v183 = vlaneseq
    %v184 = vshrl.u32 %v183, 7
    %v185 = vsub.s32 0, %v184
    %v186 = vrot.slane %v181, %v185
    %188 = vmatprep.subr.mxu0 0.0
    %189 = vmatpush1.msra.mxu0 0.0
    %190 = vmatprep.subr.mxu0 0.0
    %191 = vmatpush1.msra.mxu0 0.0
    %192 = vmatprep.subr.mxu0 0.0
    %193 = vmatpush1.msra.mxu0 0.0
    %194 = vmatprep.subr.mxu0 0.0
    %195 = vmatpush1.msra.mxu0 0.0
    %196 = vmatprep.subr.mxu0 0.0
    %197 = vmatpush1.msra.mxu0 0.0
    %198 = vmatprep.subr.mxu0 0.0
    %199 = vmatpush1.msra.mxu0 0.0
    %200 = vmatprep.subr.mxu0 0.0
    %201 = vmatpush1.msra.mxu0 0.0
    %202 = vmatprep.subr.mxu0 0.0
    %203 = vmatpush1.msra.mxu0 0.0
    %204 = vmatprep.subr.mxu0 0.0
    %205 = vmatpush1.msra.mxu0 0.0
    %206 = vmatprep.subr.mxu0 0.0
    %207 = vmatpush1.msra.mxu0 0.0
    %208 = vmatprep.subr.mxu0 0.0
    %209 = vmatpush1.msra.mxu0 0.0
    %210 = vmatprep.subr.mxu0 0.0
    %211 = vmatpush1.msra.mxu0 0.0
    %212 = vmatprep.subr.mxu0 0.0
    %213 = vmatpush1.msra.mxu0 %v180
    %214 = vmatprep.subr.mxu0 0.0
    %215 = vmatpush1.msra.mxu0 %v179
    %216 = vmatprep.subr.mxu0 0.0
    %217 = vmatpush1.msra.mxu0 %v178
    %218 = vmatprep.subr.mxu0 0.0
    %219 = vmatpush1.msra.mxu0 %v177
    %220 = vmatprep.subr.mxu0 0.0
    %221 = vmatpush2.msra.mxu0 0.0
    %222 = vmatprep.subr.mxu0 0.0
    %223 = vmatpush2.msra.mxu0 0.0
    %224 = vmatprep.subr.mxu0 0.0
    %225 = vmatpush2.msra.mxu0 0.0
    %226 = vmatprep.subr.mxu0 0.0
    %227 = vmatpush2.msra.mxu0 0.0
    %228 = vmatprep.subr.mxu0 0.0
    %229 = vmatpush2.msra.mxu0 0.0
    %230 = vmatprep.subr.mxu0 0.0
    %231 = vmatpush2.msra.mxu0 0.0
    %232 = vmatprep.subr.mxu0 0.0
    %233 = vmatpush2.msra.mxu0 0.0
    %234 = vmatprep.subr.mxu0 0.0
    %235 = vmatpush2.msra.mxu0 0.0
    %236 = vmatprep.subr.mxu0 0.0
    %237 = vmatpush2.msra.mxu0 0.0
    %238 = vmatprep.subr.mxu0 0.0
    %239 = vmatpush2.msra.mxu0 0.0
    %240 = vmatprep.subr.mxu0 0.0
    %241 = vmatpush2.msra.mxu0 0.0
    %242 = vmatprep.subr.mxu0 0.0
    %243 = vmatpush2.msra.mxu0 0.0
    %244 = vmatprep.subr.mxu0 0.0
    %245 = vmatpush2.msra.mxu0 0.0
    %246 = vmatprep.subr.mxu0 0.0
    %247 = vmatpush2.msra.mxu0 0.0
    %248 = vmatprep.subr.mxu0 0.0
    %249 = vmatpush2.msra.mxu0 0.0
    %250 = vmatprep.subr.mxu0 0.0
    %251 = vmatpush2.msra.mxu0 0.0
    %252 = vmatprep.mubr.f32.mxu0 0.0
    %253 = vmatmul.mubr.f32.gmra.mxu0 %v97
    %v254 = vpop.f32.mrf.mxu0
    %v255 = vadd.f32 %v186, %v254
    %v256 = vpop.f32.mrf.mxu0
    %257 = vmatprep.mubr.f32.mxu0 0.0
    %258 = vmatmul.mubr.f32.gmra.mxu0 %v100
    %v259 = vpop.f32.mrf.mxu0
    %v260 = vadd.f32 %v186, %v259
    %v261 = vpop.f32.mrf.mxu0
    %262 = vdwg.mxu0
    %v263 = vld [vmem:[#allocation8] sm:$0xff]
    %v264 = vld [vmem:[#allocation8 + $0x8] sm:$0xff]
    %v265 = vld [vmem:[#allocation8 + $0x10] sm:$0xff]
    %v266 = vld [vmem:[#allocation8 + $0x18] sm:$0xff]
    %v267 = vld [vmem:[%s6] sm:$0x1]
    %v269 = vlaneseq
    %v270 = vshrl.u32 %v269, 7
    %v271 = vsub.s32 0, %v270
    %v272 = vrot.slane %v267, %v271
    %274 = vmatprep.subr.mxu0 0.0
    %275 = vmatpush1.msra.mxu0 0.0
    %276 = vmatprep.subr.mxu0 0.0
    %277 = vmatpush1.msra.mxu0 0.0
    %278 = vmatprep.subr.mxu0 0.0
    %279 = vmatpush1.msra.mxu0 0.0
    %280 = vmatprep.subr.mxu0 0.0
    %281 = vmatpush1.msra.mxu0 0.0
    %282 = vmatprep.subr.mxu0 0.0
    %283 = vmatpush1.msra.mxu0 0.0
    %284 = vmatprep.subr.mxu0 0.0
    %285 = vmatpush1.msra.mxu0 0.0
    %286 = vmatprep.subr.mxu0 0.0
    %287 = vmatpush1.msra.mxu0 0.0
    %288 = vmatprep.subr.mxu0 0.0
    %289 = vmatpush1.msra.mxu0 0.0
    %290 = vmatprep.subr.mxu0 0.0
    %291 = vmatpush1.msra.mxu0 0.0
    %292 = vmatprep.subr.mxu0 0.0
    %293 = vmatpush1.msra.mxu0 0.0
    %294 = vmatprep.subr.mxu0 0.0
    %295 = vmatpush1.msra.mxu0 0.0
    %296 = vmatprep.subr.mxu0 0.0
    %297 = vmatpush1.msra.mxu0 0.0
    %298 = vmatprep.subr.mxu0 0.0
    %299 = vmatpush1.msra.mxu0 %v266
    %300 = vmatprep.subr.mxu0 0.0
    %301 = vmatpush1.msra.mxu0 %v265
    %302 = vmatprep.subr.mxu0 0.0
    %303 = vmatpush1.msra.mxu0 %v264
    %304 = vmatprep.subr.mxu0 0.0
    %305 = vmatpush1.msra.mxu0 %v263
    %306 = vmatprep.subr.mxu0 0.0
    %307 = vmatpush2.msra.mxu0 0.0
    %308 = vmatprep.subr.mxu0 0.0
    %309 = vmatpush2.msra.mxu0 0.0
    %310 = vmatprep.subr.mxu0 0.0
    %311 = vmatpush2.msra.mxu0 0.0
    %312 = vmatprep.subr.mxu0 0.0
    %313 = vmatpush2.msra.mxu0 0.0
    %314 = vmatprep.subr.mxu0 0.0
    %315 = vmatpush2.msra.mxu0 0.0
    %316 = vmatprep.subr.mxu0 0.0
    %317 = vmatpush2.msra.mxu0 0.0
    %318 = vmatprep.subr.mxu0 0.0
    %319 = vmatpush2.msra.mxu0 0.0
    %320 = vmatprep.subr.mxu0 0.0
    %321 = vmatpush2.msra.mxu0 0.0
    %322 = vmatprep.subr.mxu0 0.0
    %323 = vmatpush2.msra.mxu0 0.0
    %324 = vmatprep.subr.mxu0 0.0
    %325 = vmatpush2.msra.mxu0 0.0
    %326 = vmatprep.subr.mxu0 0.0
    %327 = vmatpush2.msra.mxu0 0.0
    %328 = vmatprep.subr.mxu0 0.0
    %329 = vmatpush2.msra.mxu0 0.0
    %330 = vmatprep.subr.mxu0 0.0
    %331 = vmatpush2.msra.mxu0 0.0
    %332 = vmatprep.subr.mxu0 0.0
    %333 = vmatpush2.msra.mxu0 0.0
    %334 = vmatprep.subr.mxu0 0.0
    %335 = vmatpush2.msra.mxu0 0.0
    %336 = vmatprep.subr.mxu0 0.0
    %337 = vmatpush2.msra.mxu0 0.0
    %338 = vmatprep.mubr.f32.mxu0 0.0
    %339 = vmatmul.mubr.f32.gmra.mxu0 %v97
    %v340 = vpop.f32.mrf.mxu0
    %v341 = vadd.f32 %v272, %v340
    %v342 = vpop.f32.mrf.mxu0
    %343 = vmatprep.mubr.f32.mxu0 0.0
    %344 = vmatmul.mubr.f32.gmra.mxu0 %v100
    %v345 = vpop.f32.mrf.mxu0
    %v346 = vadd.f32 %v272, %v345
    %v347 = vpop.f32.mrf.mxu0
    %348 = vdwg.mxu0
    %v350 = vsel %vm95, %v169, 0
    %v353 = vsel %vm95, %v255, 0
    %355 = vmatprep.subr.mxu0 0.0
    %356 = vmatpush1.xpose.msra.mxu0 0.0
    %357 = vmatprep.subr.mxu0 0.0
    %358 = vmatpush1.xpose.msra.mxu0 0.0
    %359 = vmatprep.subr.mxu0 0.0
    %360 = vmatpush1.xpose.msra.mxu0 0.0
    %361 = vmatprep.subr.mxu0 0.0
    %362 = vmatpush1.xpose.msra.mxu0 0.0
    %363 = vmatprep.subr.mxu0 0.0
    %364 = vmatpush1.xpose.msra.mxu0 0.0
    %365 = vmatprep.subr.mxu0 0.0
    %366 = vmatpush1.xpose.msra.mxu0 0.0
    %367 = vmatprep.subr.mxu0 0.0
    %368 = vmatpush1.xpose.msra.mxu0 0.0
    %369 = vmatprep.subr.mxu0 0.0
    %370 = vmatpush1.xpose.msra.mxu0 0.0
    %371 = vmatprep.subr.mxu0 0.0
    %372 = vmatpush1.xpose.msra.mxu0 0.0
    %373 = vmatprep.subr.mxu0 0.0
    %374 = vmatpush1.xpose.msra.mxu0 0.0
    %375 = vmatprep.subr.mxu0 0.0
    %376 = vmatpush1.xpose.msra.mxu0 0.0
    %377 = vmatprep.subr.mxu0 0.0
    %378 = vmatpush1.xpose.msra.mxu0 0.0
    %379 = vmatprep.subr.mxu0 0.0
    %380 = vmatpush1.xpose.msra.mxu0 0.0
    %381 = vmatprep.subr.mxu0 0.0
    %382 = vmatpush1.xpose.msra.mxu0 0.0
    %383 = vmatprep.subr.mxu0 0.0
    %384 = vmatpush1.xpose.msra.mxu0 0.0
    %385 = vmatprep.subr.mxu0 0.0
    %386 = vmatpush1.xpose.msra.mxu0 %v353
    %387 = vmatprep.subr.mxu0 0.0
    %388 = vmatpush2.xpose.msra.mxu0 0.0
    %389 = vmatprep.subr.mxu0 0.0
    %390 = vmatpush2.xpose.msra.mxu0 0.0
    %391 = vmatprep.subr.mxu0 0.0
    %392 = vmatpush2.xpose.msra.mxu0 0.0
    %393 = vmatprep.subr.mxu0 0.0
    %394 = vmatpush2.xpose.msra.mxu0 0.0
    %395 = vmatprep.subr.mxu0 0.0
    %396 = vmatpush2.xpose.msra.mxu0 0.0
    %397 = vmatprep.subr.mxu0 0.0
    %398 = vmatpush2.xpose.msra.mxu0 0.0
    %399 = vmatprep.subr.mxu0 0.0
    %400 = vmatpush2.xpose.msra.mxu0 0.0
    %401 = vmatprep.subr.mxu0 0.0
    %402 = vmatpush2.xpose.msra.mxu0 0.0
    %403 = vmatprep.subr.mxu0 0.0
    %404 = vmatpush2.xpose.msra.mxu0 0.0
    %405 = vmatprep.subr.mxu0 0.0
    %406 = vmatpush2.xpose.msra.mxu0 0.0
    %407 = vmatprep.subr.mxu0 0.0
    %408 = vmatpush2.xpose.msra.mxu0 0.0
    %409 = vmatprep.subr.mxu0 0.0
    %410 = vmatpush2.xpose.msra.mxu0 0.0
    %411 = vmatprep.subr.mxu0 0.0
    %412 = vmatpush2.xpose.msra.mxu0 0.0
    %413 = vmatprep.subr.mxu0 0.0
    %414 = vmatpush2.xpose.msra.mxu0 0.0
    %415 = vmatprep.subr.mxu0 0.0
    %416 = vmatpush2.xpose.msra.mxu0 0.0
    %417 = vmatprep.subr.mxu0 0.0
    %418 = vmatpush2.xpose.msra.mxu0 0.0
    %419 = vmatprep.mubr.f32.mxu0 0.0
    %420 = vmatmul.mubr.f32.gmra.mxu0 %v350
    %v421 = vpop.f32.mrf.mxu0
    %v422 = vadd.f32 0.0, %v421
    %v423 = vpop.f32.mrf.mxu0
    %424 = vdwg.mxu0
    %v426 = vsel %vm95, %v174, 0
    %v429 = vsel %vm95, %v260, 0
    %431 = vmatprep.subr.mxu0 0.0
    %432 = vmatpush1.xpose.msra.mxu0 0.0
    %433 = vmatprep.subr.mxu0 0.0
    %434 = vmatpush1.xpose.msra.mxu0 0.0
    %435 = vmatprep.subr.mxu0 0.0
    %436 = vmatpush1.xpose.msra.mxu0 0.0
    %437 = vmatprep.subr.mxu0 0.0
    %438 = vmatpush1.xpose.msra.mxu0 0.0
    %439 = vmatprep.subr.mxu0 0.0
    %440 = vmatpush1.xpose.msra.mxu0 0.0
    %441 = vmatprep.subr.mxu0 0.0
    %442 = vmatpush1.xpose.msra.mxu0 0.0
    %443 = vmatprep.subr.mxu0 0.0
    %444 = vmatpush1.xpose.msra.mxu0 0.0
    %445 = vmatprep.subr.mxu0 0.0
    %446 = vmatpush1.xpose.msra.mxu0 0.0
    %447 = vmatprep.subr.mxu0 0.0
    %448 = vmatpush1.xpose.msra.mxu0 0.0
    %449 = vmatprep.subr.mxu0 0.0
    %450 = vmatpush1.xpose.msra.mxu0 0.0
    %451 = vmatprep.subr.mxu0 0.0
    %452 = vmatpush1.xpose.msra.mxu0 0.0
    %453 = vmatprep.subr.mxu0 0.0
    %454 = vmatpush1.xpose.msra.mxu0 0.0
    %455 = vmatprep.subr.mxu0 0.0
    %456 = vmatpush1.xpose.msra.mxu0 0.0
    %457 = vmatprep.subr.mxu0 0.0
    %458 = vmatpush1.xpose.msra.mxu0 0.0
    %459 = vmatprep.subr.mxu0 0.0
    %460 = vmatpush1.xpose.msra.mxu0 0.0
    %461 = vmatprep.subr.mxu0 0.0
    %462 = vmatpush1.xpose.msra.mxu0 %v429
    %463 = vmatprep.subr.mxu0 0.0
    %464 = vmatpush2.xpose.msra.mxu0 0.0
    %465 = vmatprep.subr.mxu0 0.0
    %466 = vmatpush2.xpose.msra.mxu0 0.0
    %467 = vmatprep.subr.mxu0 0.0
    %468 = vmatpush2.xpose.msra.mxu0 0.0
    %469 = vmatprep.subr.mxu0 0.0
    %470 = vmatpush2.xpose.msra.mxu0 0.0
    %471 = vmatprep.subr.mxu0 0.0
    %472 = vmatpush2.xpose.msra.mxu0 0.0
    %473 = vmatprep.subr.mxu0 0.0
    %474 = vmatpush2.xpose.msra.mxu0 0.0
    %475 = vmatprep.subr.mxu0 0.0
    %476 = vmatpush2.xpose.msra.mxu0 0.0
    %477 = vmatprep.subr.mxu0 0.0
    %478 = vmatpush2.xpose.msra.mxu0 0.0
    %479 = vmatprep.subr.mxu0 0.0
    %480 = vmatpush2.xpose.msra.mxu0 0.0
    %481 = vmatprep.subr.mxu0 0.0
    %482 = vmatpush2.xpose.msra.mxu0 0.0
    %483 = vmatprep.subr.mxu0 0.0
    %484 = vmatpush2.xpose.msra.mxu0 0.0
    %485 = vmatprep.subr.mxu0 0.0
    %486 = vmatpush2.xpose.msra.mxu0 0.0
    %487 = vmatprep.subr.mxu0 0.0
    %488 = vmatpush2.xpose.msra.mxu0 0.0
    %489 = vmatprep.subr.mxu0 0.0
    %490 = vmatpush2.xpose.msra.mxu0 0.0
    %491 = vmatprep.subr.mxu0 0.0
    %492 = vmatpush2.xpose.msra.mxu0 0.0
    %493 = vmatprep.subr.mxu0 0.0
    %494 = vmatpush2.xpose.msra.mxu0 0.0
    %495 = vmatprep.mubr.f32.mxu0 0.0
    %496 = vmatmul.mubr.f32.gmra.mxu0 %v426
    %v497 = vpop.f32.mrf.mxu0
    %v498 = vadd.f32 0.0, %v497
    %v499 = vpop.f32.mrf.mxu0
    %500 = vdwg.mxu0
    %vm501 = vcmask 64512
    %v502 = vsel %vm501, %v422, -inf
    %503 = vmax.xlane.f32.xlu0 %v502
    %v504 = vpop.xlane.xlu0 %503
    %v505 = vsel %vm501, %v498, -inf
    %506 = vmax.xlane.f32.xlu0 %v505
    %v507 = vpop.xlane.xlu0 %506
    %v508 = vsub.f32 %v422, %v504
    %v509 = vsub.f32 %v498, %v507
    %v510 = vmul.f32 %v508, 1.442695
    %v511 = vpow.pop %v510
    %v512 = vmul.f32 %v509, 1.442695
    %v513 = vpow.pop %v512
    %v514 = vsel %vm501, %v511, 0.0
    %515 = vadd.xlane.f32.xlu0 %v514
    %v516 = vpop.xlane.xlu0 %515
    %v517 = vsel %vm501, %v513, 0.0
    %518 = vadd.xlane.f32.xlu0 %v517
    %v519 = vpop.xlane.xlu0 %518
    %v520 = vrcp.pop %v516
    %v521 = vrcp.pop %v519
    %v522 = vmul.f32 %v511, %v520
    %v523 = vmul.f32 %v513, %v521
    %v524 = vsel %vm501, %v522, 0.0
    %v525 = vrot.slane %v524, 4
    %v526 = vadd.f32 %v524, %v525
    %v527 = vrot.slane %v526, 2
    %v528 = vadd.f32 %v526, %v527
    %v529 = vrot.slane %v528, 1
    %v530 = vadd.f32 %v528, %v529
    %v531 = vsel %vm501, %v523, 0.0
    %v532 = vrot.slane %v531, 4
    %v533 = vadd.f32 %v531, %v532
    %v534 = vrot.slane %v533, 2
    %v535 = vadd.f32 %v533, %v534
    %v536 = vrot.slane %v535, 1
    %v537 = vadd.f32 %v535, %v536
    %v538 = vrcp.pop 8.0
    %v539 = vmul.f32 %v530, %v538
    %v540 = vmul.f32 %v537, %v538
    %v542 = vsel %vm501, %v539, 0
    %544 = vmatprep.subr.mxu0 0.0
    %545 = vmatpush1.msra.mxu0 0.0
    %546 = vmatprep.subr.mxu0 0.0
    %547 = vmatpush1.msra.mxu0 0.0
    %548 = vmatprep.subr.mxu0 0.0
    %549 = vmatpush1.msra.mxu0 0.0
    %550 = vmatprep.subr.mxu0 0.0
    %551 = vmatpush1.msra.mxu0 0.0
    %552 = vmatprep.subr.mxu0 0.0
    %553 = vmatpush1.msra.mxu0 0.0
    %554 = vmatprep.subr.mxu0 0.0
    %555 = vmatpush1.msra.mxu0 0.0
    %556 = vmatprep.subr.mxu0 0.0
    %557 = vmatpush1.msra.mxu0 0.0
    %558 = vmatprep.subr.mxu0 0.0
    %559 = vmatpush1.msra.mxu0 0.0
    %560 = vmatprep.subr.mxu0 0.0
    %561 = vmatpush1.msra.mxu0 0.0
    %562 = vmatprep.subr.mxu0 0.0
    %563 = vmatpush1.msra.mxu0 0.0
    %564 = vmatprep.subr.mxu0 0.0
    %565 = vmatpush1.msra.mxu0 0.0
    %566 = vmatprep.subr.mxu0 0.0
    %567 = vmatpush1.msra.mxu0 0.0
    %568 = vmatprep.subr.mxu0 0.0
    %569 = vmatpush1.msra.mxu0 0.0
    %570 = vmatprep.subr.mxu0 0.0
    %571 = vmatpush1.msra.mxu0 0.0
    %572 = vmatprep.subr.mxu0 0.0
    %573 = vmatpush1.msra.mxu0 0.0
    %574 = vmatprep.subr.mxu0 0.0
    %575 = vmatpush1.msra.mxu0 %v341
    %576 = vmatprep.subr.mxu0 0.0
    %577 = vmatpush2.msra.mxu0 0.0
    %578 = vmatprep.subr.mxu0 0.0
    %579 = vmatpush2.msra.mxu0 0.0
    %580 = vmatprep.subr.mxu0 0.0
    %581 = vmatpush2.msra.mxu0 0.0
    %582 = vmatprep.subr.mxu0 0.0
    %583 = vmatpush2.msra.mxu0 0.0
    %584 = vmatprep.subr.mxu0 0.0
    %585 = vmatpush2.msra.mxu0 0.0
    %586 = vmatprep.subr.mxu0 0.0
    %587 = vmatpush2.msra.mxu0 0.0
    %588 = vmatprep.subr.mxu0 0.0
    %589 = vmatpush2.msra.mxu0 0.0
    %590 = vmatprep.subr.mxu0 0.0
    %591 = vmatpush2.msra.mxu0 0.0
    %592 = vmatprep.subr.mxu0 0.0
    %593 = vmatpush2.msra.mxu0 0.0
    %594 = vmatprep.subr.mxu0 0.0
    %595 = vmatpush2.msra.mxu0 0.0
    %596 = vmatprep.subr.mxu0 0.0
    %597 = vmatpush2.msra.mxu0 0.0
    %598 = vmatprep.subr.mxu0 0.0
    %599 = vmatpush2.msra.mxu0 0.0
    %600 = vmatprep.subr.mxu0 0.0
    %601 = vmatpush2.msra.mxu0 0.0
    %602 = vmatprep.subr.mxu0 0.0
    %603 = vmatpush2.msra.mxu0 0.0
    %604 = vmatprep.subr.mxu0 0.0
    %605 = vmatpush2.msra.mxu0 0.0
    %606 = vmatprep.subr.mxu0 0.0
    %607 = vmatpush2.msra.mxu0 0.0
    %608 = vmatprep.mubr.f32.mxu0 0.0
    %609 = vmatmul.mubr.f32.gmra.mxu0 %v542
    %v610 = vpop.f32.mrf.mxu0
    %v611 = vadd.f32 0.0, %v610
    %v612 = vpop.f32.mrf.mxu0
    %613 = vdwg.mxu0
    %v615 = vsel %vm501, %v540, 0
    %617 = vmatprep.subr.mxu0 0.0
    %618 = vmatpush1.msra.mxu0 0.0
    %619 = vmatprep.subr.mxu0 0.0
    %620 = vmatpush1.msra.mxu0 0.0
    %621 = vmatprep.subr.mxu0 0.0
    %622 = vmatpush1.msra.mxu0 0.0
    %623 = vmatprep.subr.mxu0 0.0
    %624 = vmatpush1.msra.mxu0 0.0
    %625 = vmatprep.subr.mxu0 0.0
    %626 = vmatpush1.msra.mxu0 0.0
    %627 = vmatprep.subr.mxu0 0.0
    %628 = vmatpush1.msra.mxu0 0.0
    %629 = vmatprep.subr.mxu0 0.0
    %630 = vmatpush1.msra.mxu0 0.0
    %631 = vmatprep.subr.mxu0 0.0
    %632 = vmatpush1.msra.mxu0 0.0
    %633 = vmatprep.subr.mxu0 0.0
    %634 = vmatpush1.msra.mxu0 0.0
    %635 = vmatprep.subr.mxu0 0.0
    %636 = vmatpush1.msra.mxu0 0.0
    %637 = vmatprep.subr.mxu0 0.0
    %638 = vmatpush1.msra.mxu0 0.0
    %639 = vmatprep.subr.mxu0 0.0
    %640 = vmatpush1.msra.mxu0 0.0
    %641 = vmatprep.subr.mxu0 0.0
    %642 = vmatpush1.msra.mxu0 0.0
    %643 = vmatprep.subr.mxu0 0.0
    %644 = vmatpush1.msra.mxu0 0.0
    %645 = vmatprep.subr.mxu0 0.0
    %646 = vmatpush1.msra.mxu0 0.0
    %647 = vmatprep.subr.mxu0 0.0
    %648 = vmatpush1.msra.mxu0 %v346
    %649 = vmatprep.subr.mxu0 0.0
    %650 = vmatpush2.msra.mxu0 0.0
    %651 = vmatprep.subr.mxu0 0.0
    %652 = vmatpush2.msra.mxu0 0.0
    %653 = vmatprep.subr.mxu0 0.0
    %654 = vmatpush2.msra.mxu0 0.0
    %655 = vmatprep.subr.mxu0 0.0
    %656 = vmatpush2.msra.mxu0 0.0
    %657 = vmatprep.subr.mxu0 0.0
    %658 = vmatpush2.msra.mxu0 0.0
    %659 = vmatprep.subr.mxu0 0.0
    %660 = vmatpush2.msra.mxu0 0.0
    %661 = vmatprep.subr.mxu0 0.0
    %662 = vmatpush2.msra.mxu0 0.0
    %663 = vmatprep.subr.mxu0 0.0
    %664 = vmatpush2.msra.mxu0 0.0
    %665 = vmatprep.subr.mxu0 0.0
    %666 = vmatpush2.msra.mxu0 0.0
    %667 = vmatprep.subr.mxu0 0.0
    %668 = vmatpush2.msra.mxu0 0.0
    %669 = vmatprep.subr.mxu0 0.0
    %670 = vmatpush2.msra.mxu0 0.0
    %671 = vmatprep.subr.mxu0 0.0
    %672 = vmatpush2.msra.mxu0 0.0
    %673 = vmatprep.subr.mxu0 0.0
    %674 = vmatpush2.msra.mxu0 0.0
    %675 = vmatprep.subr.mxu0 0.0
    %676 = vmatpush2.msra.mxu0 0.0
    %677 = vmatprep.subr.mxu0 0.0
    %678 = vmatpush2.msra.mxu0 0.0
    %679 = vmatprep.subr.mxu0 0.0
    %680 = vmatpush2.msra.mxu0 0.0
    %681 = vmatprep.mubr.f32.mxu0 0.0
    %682 = vmatmul.mubr.f32.gmra.mxu0 %v615
    %v683 = vpop.f32.mrf.mxu0
    %v684 = vadd.f32 0.0, %v683
    %v685 = vpop.f32.mrf.mxu0
    %686 = vdwg.mxu0
    %v689 = vrot.slane %v684, 7
    %vm690 = vcmask 1041409
    %v691 = vsel %vm690, %v689, %v611
    %vm693 = vcmask 254976
    %694 = vst.msk [vmem:[#allocation10] sm:$0x3] %vm693, %v691
    // Predicated region
    $region46: #{tpu_custom_call.1} parent=1 // pred_check
      _
    $region47: #{tpu_custom_call.1} parent=1 // pred_check_branch
      %696 = sbr.rel (0) target = $region49
    $region48: #{tpu_custom_call.1} parent=1 // pred_region
      %s698 = ssub.s32 32, 32
      %699 = vsyncadd [#allocation4], %s698
      %s701 = sshll.u32 [#allocation10], 4
      %s702 = int_to_ptr.vmem [resolvable:$true] %s701
      %704 = dma.vmem_to_hbm [thread:$0]  %s702, 32, %s7, [#allocation4]
    $region49: #{tpu_custom_call.1} parent=1 // pred_fallthru
      _
    // Predicated region
    $region50: #{tpu_custom_call.1} parent=1 // pred_check
      _
    $region51: #{tpu_custom_call.1} parent=1 // pred_check_branch
      %706 = sbr.rel (0) target = $region53
    $region52: #{tpu_custom_call.1} parent=1 // pred_region
      %707 = dma.done [#allocation4], 32
    $region53: #{tpu_custom_call.1} parent=1 // pred_fallthru
      _
    %708 = vsyncpa [#allocation3], 1
    %709 = vsyncpa [#allocation6], 1
    %710 = vsyncpa [#allocation9], 1
    %711 = vsyncpa [#allocation4], 1

</llo_original>
